<compile_context>
chip_gen: v7x
topology: tpu7x:2x2x1
jax: 0.10.0
libtpu: 0.0.40
codegen_flags: <defaults>
</compile_context>

<pallas_src>
import functools

import numpy as np
import jax
import jax.numpy as jnp
from jax.experimental import pallas as pl
from jax.experimental.pallas import tpu as pltpu

NUM_EMBED = 10   # rank of the adaptive embedding (hard-coded 10 in the module)
NUM_ADJ = 3      # P_f, P_b, adaptive embedding


# ---------------------------------------------------------------------------
# Parameter-only kernel (runs once): adaptive-embedding softmax + conv fold.
#   A_eff = sum_a sum_{k=1..order-1} w[a,k] * adj_a^k     (no identity term)
# ---------------------------------------------------------------------------
def gcdl_fold_kernel(w_ref, m1_ref, m2_ref, pfb_ref, aeff_ref, *, order):
    # hoist all SMEM scalar reads once
    w = [w_ref[i] for i in range(NUM_ADJ * order)]

    # adaptive embedding: softmax(relu(M1 @ M2), dim=1), kept in f32.
    logits = jnp.dot(m1_ref[...], m2_ref[...], preferred_element_type=jnp.float32)
    logits = jnp.maximum(logits, 0.0)                       # F.relu
    m = jnp.max(logits, axis=1, keepdims=True)
    e = jnp.exp(logits - m)
    emb = e / jnp.sum(e, axis=1, keepdims=True)             # exact: off hot path

    adjs = (pfb_ref[0], pfb_ref[1], emb)

    # PyTorch channel order: [obs]*NUM_ADJ (handled via w_base in the per-call
    # kernel), then per-adjacency hops 1..order-1.
    ch = NUM_ADJ
    a_eff = None
    for a in range(NUM_ADJ):
        cur = adjs[a]
        term = w[ch] * cur
        a_eff = term if a_eff is None else a_eff + term
        ch += 1
        for _k in range(2, order):                          # extra hops if order > 2
            cur = jnp.dot(adjs[a], cur, preferred_element_type=jnp.float32)
            a_eff = a_eff + w[ch] * cur
            ch += 1

    aeff_ref[...] = a_eff


@functools.partial(jax.jit, static_argnames=("order",))
def precompute_effective_adjacency(p_f, p_b, m1, m2, conv_w, conv_b, *, order=2):
    """Hoisted, obs-independent precompute.  Returns (A_eff, [w_base, bias])."""
    s = p_f.shape[0]
    pfb = jnp.stack([p_f, p_b])                              # one DMA for both

    kernel = functools.partial(gcdl_fold_kernel, order=order)
    a_eff = pl.pallas_call(
        kernel,
        out_shape=jax.ShapeDtypeStruct((s, s), jnp.float32),
        in_specs=[
            pl.BlockSpec(memory_space=pltpu.MemorySpace.SMEM),   # conv 1x1 weights
            pl.BlockSpec((s, NUM_EMBED), lambda: (0, 0)),        # M1
            pl.BlockSpec((NUM_EMBED, s), lambda: (0, 0)),        # M2
            pl.BlockSpec((2, s, s), lambda: (0, 0, 0)),          # [P_f, P_b]
        ],
        out_specs=pl.BlockSpec((s, s), lambda: (0, 0)),
    )(conv_w, m1, m2, pfb)

    # weights on the raw-obs channels fold to a scalar, conv bias is a scalar
    scal = jnp.stack([jnp.sum(conv_w[:NUM_ADJ]), conv_b[0]])
    return a_eff, scal


# ---------------------------------------------------------------------------
# Per-call kernel: out[n] = A_eff @ obs[n] + w_base * obs[n] + bias
# obs stays in its native (N, S, F) layout; no wrapper transposes.
# ---------------------------------------------------------------------------
def gcdl_apply_kernel(scal_ref, a_ref, obs_ref, out_ref, *, n_node):
    w_base = scal_ref[0]
    bias = scal_ref[1]
    a_eff = a_ref[...]
    for node in range(n_node):                    # static, unrolled (N is small)
        x = obs_ref[node]                         # (S, F) tile
        y = jnp.dot(a_eff, x, preferred_element_type=jnp.float32)
        out_ref[node] = (y + w_base * x + bias).astype(out_ref.dtype)


@jax.jit
def graph_conv_dependency_learning_apply(obs, a_eff, scal):
    """obs: (N, S, F) f32; a_eff: (S, S) f32; scal: (2,) = [w_base, bias]."""
    n, s, f = obs.shape
    kernel = functools.partial(gcdl_apply_kernel, n_node=n)
    return pl.pallas_call(
        kernel,
        out_shape=jax.ShapeDtypeStruct((n, s, f), jnp.float32),
        in_specs=[
            pl.BlockSpec(memory_space=pltpu.MemorySpace.SMEM),   # [w_base, bias]
            pl.BlockSpec((s, s), lambda: (0, 0)),                # A_eff
            pl.BlockSpec((n, s, f), lambda: (0, 0, 0)),          # obs (full block)
        ],
        out_specs=pl.BlockSpec((n, s, f), lambda: (0, 0, 0)),
    )(scal, a_eff, obs)


def graph_conv_dependency_learning(obs, p_f, p_b, m1, m2, conv_w, conv_b, *, order=2):
    """Convenience one-shot forward (precompute + apply)."""
    a_eff, scal = precompute_effective_adjacency(
        p_f, p_b, m1, m2, conv_w, conv_b, order=order)
    return graph_conv_dependency_learning_apply(obs, a_eff, scal)


# ---------------------------------------------------------------------------
# Parameter construction (deterministic, mirrors the module's __init__)
# ---------------------------------------------------------------------------
def build_params(adj_np, num_svcs, order, key):
    adj = jnp.asarray(adj_np, jnp.float32)

    # P_f = nan_to_num(diag(rowsum(A)^-1)) @ A ; P_b uses colsum(A) instead
    rowsum = adj.sum(-1)
    colsum = adj.T.sum(-1)
    inv_row = jnp.where(rowsum > 0, 1.0 / rowsum, 0.0)
    inv_col = jnp.where(colsum > 0, 1.0 / colsum, 0.0)
    p_f = inv_row[:, None] * adj
    p_b = inv_col[:, None] * adj

    # adaptive_matrix_construction: rank-10 SVD factors of adj
    u, sv, vh = np.linalg.svd(np.asarray(adj_np, np.float64))
    sqrt_s = np.sqrt(sv[:NUM_EMBED])
    m1 = jnp.asarray(u[:, :NUM_EMBED] * sqrt_s[None, :], jnp.float32)
    m2 = jnp.asarray(sqrt_s[:, None] * vh[:NUM_EMBED, :], jnp.float32)

    # conv2D: in_channels = order * 3, out_channels = 1, kernel_size = 1
    num_ch = order * NUM_ADJ
    k_w, k_b = jax.random.split(key)
    conv_w = 0.1 * jax.random.normal(k_w, (num_ch,), jnp.float32)
    conv_b = 0.1 * jax.random.normal(k_b, (1,), jnp.float32)

    return p_f, p_b, m1, m2, conv_w, conv_b


# ---------------------------------------------------------------------------
# Pure-JAX reference (mirrors the PyTorch forward)
# ---------------------------------------------------------------------------
def reference_forward(obs, p_f, p_b, m1, m2, conv_w, conv_b, order):
    emb = jax.nn.softmax(jnp.maximum(m1 @ m2, 0.0), axis=1)
    adjs = [p_f, p_b, emb]
    mlp_input = [obs for _ in adjs]
    for a in adjs:
        cur = obs
        for _k in range(1, order):
            cur = jnp.einsum("ij,njf->nif", a, cur)
            mlp_input.append(cur)
    stacked = jnp.stack(mlp_input, axis=1)          # (N, C, S, F)
    out = jnp.einsum("c,ncsf->nsf", conv_w, stacked) + conv_b[0]
    return out


if __name__ == "__main__":
    ORDER = 2
    N_NODE, N_SVC, FEAT = 4, 16, 32

    key = jax.random.PRNGKey(0)
    k_adj, k_obs, k_conv = jax.random.split(key, 3)

    # synthetic 0/1 dependency graph
    adj_np = np.asarray(
        (jax.random.uniform(k_adj, (N_SVC, N_SVC)) > 0.5).astype(jnp.float32))

    p_f, p_b, m1, m2, conv_w, conv_b = build_params(adj_np, N_SVC, ORDER, k_conv)
    obs = jax.random.normal(k_obs, (N_NODE, N_SVC, FEAT), jnp.float32)

    # hoisted, obs-independent precompute (runs once per parameter set)
    a_eff, scal = precompute_effective_adjacency(
        p_f, p_b, m1, m2, conv_w, conv_b, order=ORDER)
    a_eff, scal = jax.block_until_ready((a_eff, scal))

    # per-call forward: single Pallas kernel, obs in native (N,S,F) layout
    out = graph_conv_dependency_learning_apply(obs, a_eff, scal)
    out = jax.block_until_ready(out)

    # correctness check against pure-JAX reference
    ref = reference_forward(obs, p_f, p_b, m1, m2, conv_w, conv_b, ORDER)
    np.testing.assert_allclose(np.asarray(out), np.asarray(ref),
                               rtol=1e-4, atol=1e-4)

    print("KERNEL_OK")
</pallas_src>

<mosaic_0001>
module attributes {stable_mosaic.version = 11 : i64} {
  func.func @gcdl_fold_kernel(%arg0: memref<6xf32, #tpu.memory_space<smem>>, %arg1: memref<16x10xf32, #tpu.memory_space<vmem>>, %arg2: memref<10x16xf32, #tpu.memory_space<vmem>>, %arg3: memref<2x16x16xf32, #tpu.memory_space<vmem>>, %arg4: memref<16x16xf32, #tpu.memory_space<vmem>>) attributes {dimension_semantics = [], scalar_prefetch = 0 : i64, scratch_operands = 0 : i64, tpu.core_type = #tpu.core_type<tc>} {
    %c3 = arith.constant 3 : index
    %0 = memref.load %arg0[%c3] : memref<6xf32, #tpu.memory_space<smem>>
    %c4 = arith.constant 4 : index
    %1 = memref.load %arg0[%c4] : memref<6xf32, #tpu.memory_space<smem>>
    %c5 = arith.constant 5 : index
    %2 = memref.load %arg0[%c5] : memref<6xf32, #tpu.memory_space<smem>>
    %c0 = arith.constant 0 : index
    %c0_0 = arith.constant 0 : index
    %3 = vector.load %arg1[%c0, %c0_0] : memref<16x10xf32, #tpu.memory_space<vmem>>, vector<16x10xf32>
    %c0_1 = arith.constant 0 : index
    %c0_2 = arith.constant 0 : index
    %4 = vector.load %arg2[%c0_1, %c0_2] : memref<10x16xf32, #tpu.memory_space<vmem>>, vector<10x16xf32>
    %cst = arith.constant dense<0.000000e+00> : vector<16x16xf32>
    %5 = tpu.matmul %3, %4, %cst {dimension_numbers = #tpu.dot_dimension_numbers<[1], [0], [0], [1], [0, 0, 1, 1], [], []>} : vector<16x10xf32>, vector<10x16xf32>, vector<16x16xf32> -> vector<16x16xf32>
    %cst_3 = arith.constant 0.000000e+00 : f32
    %6 = vector.broadcast %cst_3 : f32 to vector<16x16xf32>
    %7 = arith.maximumf %5, %6 : vector<16x16xf32>
    %cst_4 = arith.constant dense<0xFF800000> : vector<16xf32>
    %8 = vector.multi_reduction <maximumf>, %7, %cst_4 [1] : vector<16x16xf32> to vector<16xf32>
    %9 = vector.shape_cast %8 : vector<16xf32> to vector<16x1xf32>
    %10 = vector.broadcast %9 : vector<16x1xf32> to vector<16x16xf32>
    %11 = arith.subf %7, %10 : vector<16x16xf32>
    %12 = math.exp %11 : vector<16x16xf32>
    %cst_5 = arith.constant dense<0.000000e+00> : vector<16xf32>
    %13 = vector.multi_reduction <add>, %12, %cst_5 [1] : vector<16x16xf32> to vector<16xf32>
    %14 = vector.shape_cast %13 : vector<16xf32> to vector<16x1xf32>
    %15 = vector.broadcast %14 : vector<16x1xf32> to vector<16x16xf32>
    %16 = arith.divf %12, %15 : vector<16x16xf32>
    %c0_6 = arith.constant 0 : index
    %c0_7 = arith.constant 0 : index
    %c0_8 = arith.constant 0 : index
    %17 = vector.load %arg3[%c0_6, %c0_7, %c0_8] : memref<2x16x16xf32, #tpu.memory_space<vmem>>, vector<1x16x16xf32>
    %18 = vector.shape_cast %17 : vector<1x16x16xf32> to vector<16x16xf32>
    %c1 = arith.constant 1 : index
    %c0_9 = arith.constant 0 : index
    %c0_10 = arith.constant 0 : index
    %19 = vector.load %arg3[%c1, %c0_9, %c0_10] : memref<2x16x16xf32, #tpu.memory_space<vmem>>, vector<1x16x16xf32>
    %20 = vector.shape_cast %19 : vector<1x16x16xf32> to vector<16x16xf32>
    %21 = vector.broadcast %0 : f32 to vector<16x16xf32>
    %22 = arith.mulf %21, %18 : vector<16x16xf32>
    %23 = vector.broadcast %1 : f32 to vector<16x16xf32>
    %24 = arith.mulf %23, %20 : vector<16x16xf32>
    %25 = arith.addf %22, %24 : vector<16x16xf32>
    %26 = vector.broadcast %2 : f32 to vector<16x16xf32>
    %27 = arith.mulf %26, %16 : vector<16x16xf32>
    %28 = arith.addf %25, %27 : vector<16x16xf32>
    %c0_11 = arith.constant 0 : index
    %c0_12 = arith.constant 0 : index
    %29 = vector.load %arg4[%c0_11, %c0_12] : memref<16x16xf32, #tpu.memory_space<vmem>>, vector<16x16xf32>
    tpu.vector_store %arg4[%c0_11, %c0_12], %28 {strides = array<i32>} : memref<16x16xf32, #tpu.memory_space<vmem>>, vector<16x16xf32>,
    return
  }
}

</mosaic_0001>

<llo_original>
// kernel: precompute_effective_adjacency.1
$region0: #{precompute_effective_adjacency.1}
  #allocation0 [shape = 'u32[]', space=smem, size = 0x4, offset = 0x4, fixed_abs, tag = 'smem constant byte address 0x4 - core index']
  #allocation1 [shape = 'u32[144,128]{1,0:T(1,128)}', space=vmem, size = 0x12000, scoped, tag = 'internal scratch']
  %s0 = inlined_call_operand.vmem [shape: f32[6], index: 0, kind: input, shape index: {}]
  %s1 = inlined_call_operand.vmem [shape: f32[16,10], index: 1, kind: input, shape index: {}]
  %s2 = inlined_call_operand.vmem [shape: f32[10,16], index: 2, kind: input, shape index: {}]
  %s3 = inlined_call_operand.vmem [shape: f32[2,16,16], index: 3, kind: input, shape index: {}]
  %s4 = inlined_call_operand.hbm [shape: f32[16,16], index: 4, kind: output, shape index: {}]
  %s5 = sld [smem:[#allocation0]]
  $region30: #{precompute_effective_adjacency.1} parent=0
    _
  %s7 = ssub.s32 1, %s5
  %s8 = scalar_select 0, %s7, %s5
  $region1: #{precompute_effective_adjacency.1} parent=0
    #allocation2 [shape = 'u8[512]{0}', space=smem, size = 0x200, scoped, tag = 'input window, operand 0, single buffered']
    #allocation3 [shape = 's32[1]{0}', space=sflag, size = 0x4, scoped, tag = 'scoped memory for precompute_effective_adjacency.1']
    #allocation4 [shape = 's32[1]{0}', space=sflag, size = 0x4, scoped, tag = 'scoped memory for precompute_effective_adjacency.1']
    #allocation5 [shape = 'u8[8192]{0}', space=vmem, size = 0x2000, scoped, tag = 'output window, operand 0, single buffered']
    %9 = vsyncpa [#allocation4], 0
    %10 = vsyncpa [#allocation3], 0
    // Predicated region
    $region2: #{precompute_effective_adjacency.1} parent=1 // pred_check
      _
    $region3: #{precompute_effective_adjacency.1} parent=1 // pred_check_branch
      %12 = sbr.rel (0) target = $region5
    $region4: #{precompute_effective_adjacency.1} parent=1 // pred_region
      %s14 = ssub.s32 16, 16
      %15 = vsyncadd [#allocation4], %s14
      %s17 = sshll.u32 %s0, 4
      %s18 = int_to_ptr.vmem [resolvable:$true] %s17
      %20 = dma.vmem_to_smem %s18, 16, [#allocation2], [#allocation4]
    $region5: #{precompute_effective_adjacency.1} parent=1 // pred_fallthru
      _
    // Predicated region
    $region6: #{precompute_effective_adjacency.1} parent=1 // pred_check
      _
    $region7: #{precompute_effective_adjacency.1} parent=1 // pred_check_branch
      %22 = sbr.rel (0) target = $region9
    $region8: #{precompute_effective_adjacency.1} parent=1 // pred_region
      _
    $region9: #{precompute_effective_adjacency.1} parent=1 // pred_fallthru
      _
    // Predicated region
    $region10: #{precompute_effective_adjacency.1} parent=1 // pred_check
      _
    $region11: #{precompute_effective_adjacency.1} parent=1 // pred_check_branch
      %24 = sbr.rel (0) target = $region13
    $region12: #{precompute_effective_adjacency.1} parent=1 // pred_region
      _
    $region13: #{precompute_effective_adjacency.1} parent=1 // pred_fallthru
      _
    // Predicated region
    $region14: #{precompute_effective_adjacency.1} parent=1 // pred_check
      _
    $region15: #{precompute_effective_adjacency.1} parent=1 // pred_check_branch
      %26 = sbr.rel (0) target = $region17
    $region16: #{precompute_effective_adjacency.1} parent=1 // pred_region
      _
    $region17: #{precompute_effective_adjacency.1} parent=1 // pred_fallthru
      _
    // Predicated region
    $region18: #{precompute_effective_adjacency.1} parent=1 // pred_check
      _
    $region19: #{precompute_effective_adjacency.1} parent=1 // pred_check_branch
      %28 = sbr.rel (0) target = $region21
    $region20: #{precompute_effective_adjacency.1} parent=1 // pred_region
      %29 = dma.done [#allocation4], 16
    $region21: #{precompute_effective_adjacency.1} parent=1 // pred_fallthru
      _
    %30 = sfence
    %s31 = sld [smem:[#allocation2 + $0x3]]
    %s32 = sld [smem:[#allocation2 + $0x4]]
    %s33 = sld [smem:[#allocation2 + $0x5]]
    %v34 = vld [vmem:[%s1] sm:$0xff]
    %v35 = vld [vmem:[%s1 + $0x8] sm:$0xff]
    %v36 = vld [vmem:[%s2] sm:$0xff]
    %v37 = vld [vmem:[%s2 + $0x8] sm:$0x3]
    %vm38 = vcmask 80896
    %v40 = vsel %vm38, %v34, 0
    %v43 = vsel %vm38, %v35, 0
    %vm45 = vcmask 1041408
    %v47 = vsel %vm45, %v37, 0
    %49 = vmatprep.subr.mxu0 0.0
    %50 = vmatpush1.msra.mxu0 %v36
    %51 = vmatprep.subr.mxu0 0.0
    %52 = vmatpush1.msra.mxu0 %v47
    %53 = vmatprep.subr.mxu0 0.0
    %54 = vmatpush1.msra.mxu0 0.0
    %55 = vmatprep.subr.mxu0 0.0
    %56 = vmatpush1.msra.mxu0 0.0
    %57 = vmatprep.subr.mxu0 0.0
    %58 = vmatpush1.msra.mxu0 0.0
    %59 = vmatprep.subr.mxu0 0.0
    %60 = vmatpush1.msra.mxu0 0.0
    %61 = vmatprep.subr.mxu0 0.0
    %62 = vmatpush1.msra.mxu0 0.0
    %63 = vmatprep.subr.mxu0 0.0
    %64 = vmatpush1.msra.mxu0 0.0
    %65 = vmatprep.subr.mxu0 0.0
    %66 = vmatpush1.msra.mxu0 0.0
    %67 = vmatprep.subr.mxu0 0.0
    %68 = vmatpush1.msra.mxu0 0.0
    %69 = vmatprep.subr.mxu0 0.0
    %70 = vmatpush1.msra.mxu0 0.0
    %71 = vmatprep.subr.mxu0 0.0
    %72 = vmatpush1.msra.mxu0 0.0
    %73 = vmatprep.subr.mxu0 0.0
    %74 = vmatpush1.msra.mxu0 0.0
    %75 = vmatprep.subr.mxu0 0.0
    %76 = vmatpush1.msra.mxu0 0.0
    %77 = vmatprep.subr.mxu0 0.0
    %78 = vmatpush1.msra.mxu0 0.0
    %79 = vmatprep.subr.mxu0 0.0
    %80 = vmatpush1.msra.mxu0 0.0
    %81 = vmatprep.subr.mxu0 0.0
    %82 = vmatpush1.msra.mxu0 0.0
    %83 = vmatprep.subr.mxu0 0.0
    %84 = vmatpush1.msra.mxu0 0.0
    %85 = vmatprep.subr.mxu0 0.0
    %86 = vmatpush1.msra.mxu0 0.0
    %87 = vmatprep.subr.mxu0 0.0
    %88 = vmatpush1.msra.mxu0 0.0
    %89 = vmatprep.subr.mxu0 0.0
    %90 = vmatpush1.msra.mxu0 0.0
    %91 = vmatprep.subr.mxu0 0.0
    %92 = vmatpush1.msra.mxu0 0.0
    %93 = vmatprep.subr.mxu0 0.0
    %94 = vmatpush1.msra.mxu0 0.0
    %95 = vmatprep.subr.mxu0 0.0
    %96 = vmatpush1.msra.mxu0 0.0
    %97 = vmatprep.subr.mxu0 0.0
    %98 = vmatpush1.msra.mxu0 0.0
    %99 = vmatprep.subr.mxu0 0.0
    %100 = vmatpush1.msra.mxu0 0.0
    %101 = vmatprep.subr.mxu0 0.0
    %102 = vmatpush1.msra.mxu0 0.0
    %103 = vmatprep.subr.mxu0 0.0
    %104 = vmatpush1.msra.mxu0 0.0
    %105 = vmatprep.subr.mxu0 0.0
    %106 = vmatpush1.msra.mxu0 0.0
    %107 = vmatprep.subr.mxu0 0.0
    %108 = vmatpush1.msra.mxu0 0.0
    %109 = vmatprep.subr.mxu0 0.0
    %110 = vmatpush1.msra.mxu0 0.0
    %111 = vmatprep.subr.mxu0 0.0
    %112 = vmatpush1.msra.mxu0 0.0
    %113 = vmatprep.mubr.f32.mxu0 0.0
    %114 = vmatmul.mubr.f32.gmra.mrb[0].mxu0 %v40
    %v115 = vpop.f32.mrb[0].mxu0
    %v116 = vadd.f32 0.0, %v115
    %v117 = vpop.f32.mrb[0].mxu0
    %118 = vmatprep.mubr.f32.mxu0 0.0
    %119 = vmatmul.mubr.f32.gmra.mrb[0].mxu0 %v43
    %v120 = vpop.f32.mrb[0].mxu0
    %v121 = vadd.f32 0.0, %v120
    %v122 = vpop.f32.mrb[0].mxu0
    %123 = vdwg.mxu0
    %v124 = vmax.f32 %v116, 0.0
    %v125 = vmax.f32 %v121, 0.0
    %vm126 = vcmask 130048
    %v127 = vsel %vm126, %v124, -inf
    %128 = vmax.xlane.f32.xlu0 %v127
    %v129 = vpop.xlane.xlu0 %128
    %v130 = vsel %vm126, %v125, -inf
    %131 = vmax.xlane.f32.xlu0 %v130
    %v132 = vpop.xlane.xlu0 %131
    %v133 = vsub.f32 %v124, %v129
    %v134 = vsub.f32 %v125, %v132
    %v135 = vmul.f32 %v133, 1.442695
    %v136 = vpow.pop %v135
    %v137 = vmul.f32 %v134, 1.442695
    %v138 = vpow.pop %v137
    %v139 = vsel %vm126, %v136, 0.0
    %140 = vadd.xlane.f32.xlu0 %v139
    %v141 = vpop.xlane.xlu0 %140
    %v142 = vsel %vm126, %v138, 0.0
    %143 = vadd.xlane.f32.xlu0 %v142
    %v144 = vpop.xlane.xlu0 %143
    %v145 = vrcp.pop %v141
    %v146 = vmul.f32 %v136, %v145
    %v147 = vrcp.pop %v144
    %v148 = vmul.f32 %v138, %v147
    %v149 = vld [vmem:[%s3] sm:$0xff]
    %v150 = vld [vmem:[%s3 + $0x8] sm:$0xff]
    %s151 = scalar_lea.vmem %s3, 16
    %v152 = vld [vmem:[%s151] sm:$0xff]
    %v153 = vld [vmem:[%s151 + $0x8] sm:$0xff]
    %v154 = vstv %s31
    %v155 = vmul.f32 %v154, %v149
    %v156 = vmul.f32 %v154, %v150
    %v157 = vstv %s32
    %v158 = vmul.f32 %v157, %v152
    %v159 = vmul.f32 %v157, %v153
    %v160 = vadd.f32 %v155, %v158
    %v161 = vadd.f32 %v156, %v159
    %v162 = vstv %s33
    %v163 = vmul.f32 %v162, %v146
    %v164 = vmul.f32 %v162, %v148
    %v165 = vadd.f32 %v160, %v163
    %v166 = vadd.f32 %v161, %v164
    %167 = vst.msk [vmem:[#allocation5] sm:$0xff] %vm126, %v165
    %168 = vst.msk [vmem:[#allocation5 + $0x8] sm:$0xff] %vm126, %v166
    // Predicated region
    $region22: #{precompute_effective_adjacency.1} parent=1 // pred_check
      _
    $region23: #{precompute_effective_adjacency.1} parent=1 // pred_check_branch
      %170 = sbr.rel (0) target = $region25
    $region24: #{precompute_effective_adjacency.1} parent=1 // pred_region
      %s172 = ssub.s32 256, 256
      %173 = vsyncadd [#allocation3], %s172
      %s174 = sshll.u32 [#allocation5], 4
      %s175 = int_to_ptr.vmem [resolvable:$true] %s174
      %180 = dma.vmem_to_hbm [thread:$0]  %s175, 256, %s4, [#allocation3], 128, 128, 8
    $region25: #{precompute_effective_adjacency.1} parent=1 // pred_fallthru
      _
    // Predicated region
    $region26: #{precompute_effective_adjacency.1} parent=1 // pred_check
      _
    $region27: #{precompute_effective_adjacency.1} parent=1 // pred_check_branch
      %182 = sbr.rel (0) target = $region29
    $region28: #{precompute_effective_adjacency.1} parent=1 // pred_region
      %183 = dma.done [#allocation3], 256
    $region29: #{precompute_effective_adjacency.1} parent=1 // pred_fallthru
      _
    %184 = vsyncpa [#allocation3], 1
    %185 = vsyncpa [#allocation4], 1

</llo_original>
